<compile_context>
chip_gen: v7x
topology: tpu7x:2x2x1
jax: 0.10.0
libtpu: 0.0.40
codegen_flags: <defaults>
</compile_context>

<pallas_src>
import functools

import jax
import jax.numpy as jnp
from jax import lax
from jax.experimental import pallas as pl
from jax.experimental.pallas import tpu as pltpu

# Matches EPSILON_DEFAULT used in the reference C-RNN-GAN implementation.
EPSILON_DEFAULT = 1e-40

_F32_TINY = float(jnp.finfo(jnp.float32).tiny)  # smallest normal f32
_LANES = 128
_SUBLANES = 8
_TARGET_BLOCK_BYTES = 2 << 20  # ~2 MiB per input block


def _round_up(x, m):
    return (x + m - 1) // m * m


def _dloss_kernel(real_ref, gen_ref, out_ref, acc_ref, *,
                  eps, label_smoothing, total_valid, needs_mask):
    """Accumulating reduction kernel over grid (shard, row_tile_step)."""
    s = pl.program_id(0)
    k = pl.program_id(1)
    n_k = pl.num_programs(1)
    row_tile, lanes = real_ref.shape

    @pl.when(k == 0)
    def _():
        acc_ref[...] = jnp.zeros_like(acc_ref)

    lr = real_ref[...].astype(jnp.float32)
    lg = gen_ref[...].astype(jnp.float32)

    p_real = jnp.clip(lr, eps, 1.0)
    p_gen = jnp.clip(1.0 - lg, eps, 1.0)

    if label_smoothing:
        # Matches torch: p_fake uses the already-clamped real logits.
        p_fake = jnp.clip(1.0 - p_real, eps, 1.0)
        loss = -(0.9 * jnp.log(p_real) + 0.1 * jnp.log(p_fake)
                 + jnp.log(p_gen))
    else:
        loss = -(jnp.log(p_real) + jnp.log(p_gen))

    if needs_mask:
        # Mask padded / out-of-range elements.  Indices are derived from the
        # (un-clamped) grid position, so duplicated or partially-OOB blocks
        # contribute exactly zero.  Pure VPU work -> free filler here.
        row0 = (s * n_k + k) * row_tile
        rows = row0 + lax.broadcasted_iota(jnp.int32, (row_tile, lanes), 0)
        cols = lax.broadcasted_iota(jnp.int32, (row_tile, lanes), 1)
        loss = jnp.where(rows * lanes + cols < total_valid, loss, 0.0)

    # Lane-dense accumulator: reduce only across sublane groups (pure VPU
    # adds); the cross-lane reduce happens exactly once in finalize.
    acc_ref[...] += jnp.sum(
        loss.reshape(row_tile // _SUBLANES, _SUBLANES, lanes), axis=0)

    @pl.when(k == n_k - 1)
    def _():
        out_ref[...] = jnp.sum(acc_ref[...]).reshape(1, 1, 1)


def dloss_pallas(logits_real, logits_gen, *, label_smoothing=False,
                 eps=EPSILON_DEFAULT):
    """Pallas implementation of DLoss.forward -> scalar mean loss (f32)."""
    assert logits_real.shape == logits_gen.shape
    total = int(logits_real.size)
    # eps below f32 tiny is flushed to zero on the TPU VPU (clamp would be a
    # no-op and log() could hit -inf); floor it at the smallest normal f32.
    eps_eff = float(max(eps, _F32_TINY))

    dtype = logits_real.dtype
    itemsize = jnp.dtype(dtype).itemsize

    # Lane-dense [slab_rows, 128] slab; slab_rows is a multiple of 8 so every
    # block offset / partial DMA is sublane-aligned.
    slab_rows = _round_up(max(1, pl.cdiv(total, _LANES)), _SUBLANES)
    slab_elems = slab_rows * _LANES

    def to_slab(x):
        flat = x.reshape(-1)
        if slab_elems != total:
            # Pad with 0.5 (finite through clamp/log); masked out in-kernel.
            flat = jnp.pad(flat, (0, slab_elems - total), constant_values=0.5)
        return flat.reshape(slab_rows, _LANES)
        # When slab_elems == total these reshapes are free bitcasts.

    lr2 = to_slab(logits_real)
    lg2 = to_slab(logits_gen)

    # Byte-targeted row tile (~2 MiB per input block), multiple of 8 rows.
    row_tile = max(_SUBLANES,
                   (_TARGET_BLOCK_BYTES // (_LANES * itemsize))
                   // _SUBLANES * _SUBLANES)
    row_tile = min(row_tile, slab_rows)

    total_blocks = pl.cdiv(slab_rows, row_tile)
    # Leading parallel axis: lets the two v7x TensorCores each stream half the
    # blocks; degenerates to a harmless size-<=2 outer loop on v5e/v6e.
    n_shards = 2 if total_blocks > 1 else 1
    n_k = pl.cdiv(total_blocks, n_shards)

    covered_elems = n_shards * n_k * row_tile * _LANES
    needs_mask = covered_elems != total

    kernel = functools.partial(
        _dloss_kernel, eps=eps_eff, label_smoothing=bool(label_smoothing),
        total_valid=total, needs_mask=needs_mask)

    def idx(s, k):
        # Clamp fully out-of-range grid cells (odd block counts) onto the last
        # real block; their contribution is masked to zero in the kernel.
        return (jnp.minimum(s * n_k + k, total_blocks - 1), 0)

    in_spec = pl.BlockSpec((row_tile, _LANES), idx)

    partials = pl.pallas_call(
        kernel,
        out_shape=jax.ShapeDtypeStruct((n_shards, 1, 1), jnp.float32),
        grid_spec=pltpu.PrefetchScalarGridSpec(
            num_scalar_prefetch=0,
            grid=(n_shards, n_k),
            in_specs=[in_spec, in_spec],
            out_specs=pl.BlockSpec((1, 1, 1), lambda s, k: (s, 0, 0)),
            scratch_shapes=[pltpu.VMEM((_SUBLANES, _LANES), jnp.float32)],
        ),
        compiler_params=pltpu.CompilerParams(
            dimension_semantics=("parallel", "arbitrary"),
            vmem_limit_bytes=32 * 1024 * 1024),
    )(lr2, lg2)

    return jnp.sum(partials) / total


def dloss_ref(logits_real, logits_gen, *, label_smoothing=False,
              eps=EPSILON_DEFAULT):
    """Pure-JAX reference mirroring the PyTorch forward exactly."""
    lr = jnp.clip(logits_real.astype(jnp.float32), eps, 1.0)
    d_loss_real = -jnp.log(lr)
    if label_smoothing:
        p_fake = jnp.clip(1.0 - lr, eps, 1.0)
        d_loss_fake = -jnp.log(p_fake)
        d_loss_real = 0.9 * d_loss_real + 0.1 * d_loss_fake
    lg = jnp.clip(1.0 - logits_gen.astype(jnp.float32), eps, 1.0)
    d_loss_gen = -jnp.log(lg)
    return jnp.mean(d_loss_real + d_loss_gen)


if __name__ == "__main__":
    # DLoss has no learnable parameters; only discriminator outputs
    # (probabilities in (0,1)) are needed.
    key = jax.random.PRNGKey(0)
    k1, k2 = jax.random.split(key)

    # Lane-aligned (copy-free fast path), lane-ragged, and fully ragged shapes.
    shapes = [(2, 8, 128), (2, 8, 32), (3, 7, 11)]
    for shape in shapes:
        logits_real = jax.nn.sigmoid(
            jax.random.normal(k1, shape, dtype=jnp.float32))
        logits_gen = jax.nn.sigmoid(
            jax.random.normal(k2, shape, dtype=jnp.float32))
        for smooth in (False, True):
            out = dloss_pallas(logits_real, logits_gen,
                               label_smoothing=smooth)
            out = jax.block_until_ready(out)
            ref = dloss_ref(logits_real, logits_gen, label_smoothing=smooth)
            assert jnp.allclose(out, ref, rtol=1e-5, atol=1e-5), (
                shape, smooth, out, ref)

    print("KERNEL_OK")
</pallas_src>

<mosaic_0001>
module attributes {stable_mosaic.version = 11 : i64} {
  func.func @_dloss_kernel(%arg0: i32, %arg1: i32, %arg2: memref<16x128xf32, #tpu.memory_space<vmem>>, %arg3: memref<16x128xf32, #tpu.memory_space<vmem>>, %arg4: memref<1x1x1xf32, #tpu.memory_space<vmem>>, %arg5: memref<8x128xf32, #tpu.memory_space<vmem>>) attributes {dimension_semantics = [#tpu.dimension_semantics<parallel>, #tpu.dimension_semantics<arbitrary>], iteration_bounds = array<i64: 1, 1>, scalar_prefetch = 0 : i64, scratch_operands = 1 : i64, tpu.core_type = #tpu.core_type<tc>, window_params = [{transform_indices = @transform_0, window_bounds = array<i64: 16, 128>}, {transform_indices = @transform_1, window_bounds = array<i64: 16, 128>}, {transform_indices = @transform_2, window_bounds = array<i64: 1, 1, 1>}]} {
    %c0_i32 = arith.constant 0 : i32
    %0 = arith.cmpi eq, %arg1, %c0_i32 : i32
    %1 = arith.extui %0 : i1 to i32
    %c0_i32_0 = arith.constant 0 : i32
    %2 = arith.cmpi ne, %1, %c0_i32_0 : i32
    scf.if %2 {
      %cst_16 = arith.constant 0.000000e+00 : f32
      %28 = vector.broadcast %cst_16 : f32 to vector<8x128xf32>
      %c0_17 = arith.constant 0 : index
      %c0_18 = arith.constant 0 : index
      %29 = vector.load %arg5[%c0_17, %c0_18] : memref<8x128xf32, #tpu.memory_space<vmem>>, vector<8x128xf32>
      tpu.vector_store %arg5[%c0_17, %c0_18], %28 {strides = array<i32>} : memref<8x128xf32, #tpu.memory_space<vmem>>, vector<8x128xf32>,
    } else {
    }
    %c0 = arith.constant 0 : index
    %c0_1 = arith.constant 0 : index
    %3 = vector.load %arg2[%c0, %c0_1] : memref<16x128xf32, #tpu.memory_space<vmem>>, vector<16x128xf32>
    %c0_2 = arith.constant 0 : index
    %c0_3 = arith.constant 0 : index
    %4 = vector.load %arg3[%c0_2, %c0_3] : memref<16x128xf32, #tpu.memory_space<vmem>>, vector<16x128xf32>
    %cst = arith.constant 1.17549435E-38 : f32
    %cst_4 = arith.constant 1.000000e+00 : f32
    %5 = vector.broadcast %cst : f32 to vector<16x128xf32>
    %6 = arith.maximumf %5, %3 : vector<16x128xf32>
    %7 = vector.broadcast %cst_4 : f32 to vector<16x128xf32>
    %8 = arith.minimumf %7, %6 : vector<16x128xf32>
    %cst_5 = arith.constant 1.000000e+00 : f32
    %9 = vector.broadcast %cst_5 : f32 to vector<16x128xf32>
    %10 = arith.subf %9, %4 : vector<16x128xf32>
    %cst_6 = arith.constant 1.17549435E-38 : f32
    %cst_7 = arith.constant 1.000000e+00 : f32
    %11 = vector.broadcast %cst_6 : f32 to vector<16x128xf32>
    %12 = arith.maximumf %11, %10 : vector<16x128xf32>
    %13 = vector.broadcast %cst_7 : f32 to vector<16x128xf32>
    %14 = arith.minimumf %13, %12 : vector<16x128xf32>
    %15 = math.log %8 : vector<16x128xf32>
    %16 = math.log %14 : vector<16x128xf32>
    %17 = arith.addf %15, %16 : vector<16x128xf32>
    %cst_8 = arith.constant 0.000000e+00 : f32
    %18 = vector.broadcast %cst_8 : f32 to vector<16x128xf32>
    %19 = arith.subf %18, %17 : vector<16x128xf32>
    %c0_9 = arith.constant 0 : index
    %c0_10 = arith.constant 0 : index
    %20 = vector.load %arg5[%c0_9, %c0_10] : memref<8x128xf32, #tpu.memory_space<vmem>>, vector<8x128xf32>
    %21 = vector.shape_cast %19 : vector<16x128xf32> to vector<2x8x128xf32>
    %cst_11 = arith.constant dense<0.000000e+00> : vector<8x128xf32>
    %22 = vector.multi_reduction <add>, %21, %cst_11 [0] : vector<2x8x128xf32> to vector<8x128xf32>
    %23 = arith.addf %20, %22 : vector<8x128xf32>
    %c0_12 = arith.constant 0 : index
    %c0_13 = arith.constant 0 : index
    %24 = vector.load %arg5[%c0_12, %c0_13] : memref<8x128xf32, #tpu.memory_space<vmem>>, vector<8x128xf32>
    tpu.vector_store %arg5[%c0_12, %c0_13], %23 {strides = array<i32>} : memref<8x128xf32, #tpu.memory_space<vmem>>, vector<8x128xf32>,
    %c0_i32_14 = arith.constant 0 : i32
    %25 = arith.cmpi eq, %arg1, %c0_i32_14 : i32
    %26 = arith.extui %25 : i1 to i32
    %c0_i32_15 = arith.constant 0 : i32
    %27 = arith.cmpi ne, %26, %c0_i32_15 : i32
    scf.if %27 {
      %c0_16 = arith.constant 0 : index
      %c0_17 = arith.constant 0 : index
      %28 = vector.load %arg5[%c0_16, %c0_17] : memref<8x128xf32, #tpu.memory_space<vmem>>, vector<8x128xf32>
      %29 = vector.shape_cast %28 : vector<8x128xf32> to vector<1x8x128xf32>
      %cst_18 = arith.constant dense<0.000000e+00> : vector<1xf32>
      %30 = vector.multi_reduction <add>, %29, %cst_18 [1, 2] : vector<1x8x128xf32> to vector<1xf32>
      %31 = vector.shape_cast %30 : vector<1xf32> to vector<1x1x1xf32>
      %32 = vector.extract %31[0, 0, 0] : f32 from vector<1x1x1xf32>
      %33 = vector.broadcast %32 : f32 to vector<1x1x1xf32>
      %c0_19 = arith.constant 0 : index
      %c0_20 = arith.constant 0 : index
      %c0_21 = arith.constant 0 : index
      %34 = vector.load %arg4[%c0_19, %c0_20, %c0_21] : memref<1x1x1xf32, #tpu.memory_space<vmem>>, vector<1x1x1xf32>
      tpu.vector_store %arg4[%c0_19, %c0_20, %c0_21], %33 {strides = array<i32>} : memref<1x1x1xf32, #tpu.memory_space<vmem>>, vector<1x1x1xf32>,
    } else {
    }
    return
  }
  func.func @transform_0(%arg0: i32, %arg1: i32) -> (i32, i32) {
    %c1_i32 = arith.constant 1 : i32
    %0 = arith.muli %arg0, %c1_i32 : i32
    %1 = arith.addi %0, %arg1 : i32
    %c0_i32 = arith.constant 0 : i32
    %2 = arith.minsi %1, %c0_i32 : i32
    %c0_i32_0 = arith.constant 0 : i32
    %c0_i32_1 = arith.constant 0 : i32
    return %2, %c0_i32_0 : i32, i32
  }
  func.func @transform_1(%arg0: i32, %arg1: i32) -> (i32, i32) {
    %c1_i32 = arith.constant 1 : i32
    %0 = arith.muli %arg0, %c1_i32 : i32
    %1 = arith.addi %0, %arg1 : i32
    %c0_i32 = arith.constant 0 : i32
    %2 = arith.minsi %1, %c0_i32 : i32
    %c0_i32_0 = arith.constant 0 : i32
    %c0_i32_1 = arith.constant 0 : i32
    return %2, %c0_i32_0 : i32, i32
  }
  func.func @transform_2(%arg0: i32, %arg1: i32) -> (i32, i32, i32) {
    %c0_i32 = arith.constant 0 : i32
    %c0_i32_0 = arith.constant 0 : i32
    %c0_i32_1 = arith.constant 0 : i32
    return %arg0, %c0_i32, %c0_i32_0 : i32, i32, i32
  }
}

</mosaic_0001>

<llo_original>
// kernel: tpu_custom_call.1
$region0: #{tpu_custom_call.1}
  #allocation0 [shape = 'u32[]', space=smem, size = 0x4, offset = 0x4, fixed_abs, tag = 'smem constant byte address 0x4 - core index']
  #allocation1 [shape = 'u32[144,128]{1,0:T(1,128)}', space=vmem, size = 0x12000, scoped, tag = 'internal scratch']
  #allocation2 [shape = 'f32[8,128]{1,0:T(8,128)}', space=vmem, size = 0x1000, scoped, tag = 'scratch operand']
  %s0 = inlined_call_operand.hbm [shape: f32[16,128], index: 0, kind: input, shape index: {}]
  %s1 = inlined_call_operand.hbm [shape: f32[16,128], index: 1, kind: input, shape index: {}]
  %s2 = inlined_call_operand.hbm [shape: f32[1,1,1], index: 2, kind: output, shape index: {}]
  %s3 = sld [smem:[#allocation0]]
  $region34: #{tpu_custom_call.1} parent=0
    _
  %s5 = ssub.s32 1, %s3
  %s6 = scalar_select 0, %s5, %s3
  $region1: #{tpu_custom_call.1} parent=0
    #allocation3 [shape = 'u8[8192]{0}', space=vmem, size = 0x2000, scoped, tag = 'input window, operand 0, single buffered']
    #allocation4 [shape = 's32[1]{0}', space=sflag, size = 0x4, scoped, tag = 'scoped memory for tpu_custom_call.1']
    #allocation5 [shape = 's32[1]{0}', space=sflag, size = 0x4, scoped, tag = 'scoped memory for tpu_custom_call.1']
    #allocation6 [shape = 'u8[8192]{0}', space=vmem, size = 0x2000, scoped, tag = 'input window, operand 1, single buffered']
    #allocation7 [shape = 's32[1]{0}', space=sflag, size = 0x4, scoped, tag = 'scoped memory for tpu_custom_call.1']
    #allocation8 [shape = 'u8[512]{0}', space=vmem, size = 0x400, scoped, tag = 'output window, operand 0, single buffered']
    %7 = vsyncpa [#allocation4], 0
    %8 = vsyncpa [#allocation7], 0
    %9 = vsyncpa [#allocation5], 0
    // Predicated region
    $region2: #{tpu_custom_call.1} parent=1 // pred_check
      _
    $region3: #{tpu_custom_call.1} parent=1 // pred_check_branch
      %11 = sbr.rel (0) target = $region5
    $region4: #{tpu_custom_call.1} parent=1 // pred_region
      %s12 = sadd.s32 0, 0
      %p13 = scmp.lt.s32.totalorder %s12, 0
      %s14 = scalar_select %p13, %s12, 0
      %s15 = smul.u32 2, %s14
      %s17 = ssub.s32 256, 256
      %18 = vsyncadd [#allocation4], %s17
      %s19 = smul.addr %s15, 128
      %s20 = scalar_lea.hbm %s0, %s19
      %s21 = sshll.u32 [#allocation3], 4
      %s22 = int_to_ptr.vmem [resolvable:$true] %s21
      %27 = dma.hbm_to_vmem [thread:$0]  %s20, 256, %s22, [#allocation4], 128, 128, 8
    $region5: #{tpu_custom_call.1} parent=1 // pred_fallthru
      _
    // Predicated region
    $region6: #{tpu_custom_call.1} parent=1 // pred_check
      _
    $region7: #{tpu_custom_call.1} parent=1 // pred_check_branch
      %29 = sbr.rel (0) target = $region9
    $region8: #{tpu_custom_call.1} parent=1 // pred_region
      %s30 = sadd.s32 0, 0
      %p31 = scmp.lt.s32.totalorder %s30, 0
      %s32 = scalar_select %p31, %s30, 0
      %s33 = smul.u32 2, %s32
      %s35 = ssub.s32 256, 256
      %36 = vsyncadd [#allocation7], %s35
      %s37 = smul.addr %s33, 128
      %s38 = scalar_lea.hbm %s1, %s37
      %s39 = sshll.u32 [#allocation6], 4
      %s40 = int_to_ptr.vmem [resolvable:$true] %s39
      %45 = dma.hbm_to_vmem [thread:$0]  %s38, 256, %s40, [#allocation7], 128, 128, 8
    $region9: #{tpu_custom_call.1} parent=1 // pred_fallthru
      _
    // Predicated region
    $region10: #{tpu_custom_call.1} parent=1 // pred_check
      _
    $region11: #{tpu_custom_call.1} parent=1 // pred_check_branch
      %47 = sbr.rel (0) target = $region13
    $region12: #{tpu_custom_call.1} parent=1 // pred_region
      %48 = dma.done [#allocation4], 256
    $region13: #{tpu_custom_call.1} parent=1 // pred_fallthru
      _
    // Predicated region
    $region14: #{tpu_custom_call.1} parent=1 // pred_check
      _
    $region15: #{tpu_custom_call.1} parent=1 // pred_check_branch
      %50 = sbr.rel (0) target = $region17
    $region16: #{tpu_custom_call.1} parent=1 // pred_region
      %51 = dma.done [#allocation7], 256
    $region17: #{tpu_custom_call.1} parent=1 // pred_fallthru
      _
    %s52 = sadd.s32 0, 0
    %p53 = scmp.lt.s32.totalorder %s52, 0
    %s54 = scalar_select %p53, %s52, 0
    %s55 = smul.u32 2, %s54
    %s56 = sadd.s32 0, 0
    %p57 = scmp.lt.s32.totalorder %s56, 0
    %s58 = scalar_select %p57, %s56, 0
    %s59 = smul.u32 2, %s58
    %p60 = scmp.eq.s32.totalorder 0, 0
    // Predicated region
    $region18: #{tpu_custom_call.1} parent=1 // pred_check
      %p61 = pneg %p60
    $region19: #{tpu_custom_call.1} parent=1 // pred_check_branch
      %63 = sbr.rel (%p61) target = $region21
    $region20: #{tpu_custom_call.1} parent=1 // pred_region
      %64 = vst [vmem:[#allocation2] sm:$0xff] 0.0
    $region21: #{tpu_custom_call.1} parent=1 // pred_fallthru
      _
    %v65 = vld [vmem:[#allocation3] sm:$0xff]
    %v66 = vld [vmem:[#allocation3 + $0x8] sm:$0xff]
    %v67 = vld [vmem:[#allocation6] sm:$0xff]
    %v68 = vld [vmem:[#allocation6 + $0x8] sm:$0xff]
    %v69 = vmax.f32 %v65, 1.1754944e-38
    %v70 = vmax.f32 %v66, 1.1754944e-38
    %v71 = vmin.f32 %v69, 1.0
    %v72 = vmin.f32 %v70, 1.0
    %v73 = vsub.f32 1.0, %v67
    %v74 = vsub.f32 1.0, %v68
    %v75 = vmax.f32 %v73, 1.1754944e-38
    %v76 = vmax.f32 %v74, 1.1754944e-38
    %v77 = vmin.f32 %v75, 1.0
    %v78 = vmin.f32 %v76, 1.0
    %v79 = vlog2.pop %v71
    %v80 = vmul.f32 %v79, 0.6931472
    %v81 = vlog2.pop %v72
    %v82 = vmul.f32 %v81, 0.6931472
    %v83 = vlog2.pop %v77
    %v84 = vmul.f32 %v83, 0.6931472
    %v85 = vlog2.pop %v78
    %v86 = vmul.f32 %v85, 0.6931472
    %v87 = vadd.f32 %v80, %v84
    %v88 = vadd.f32 %v82, %v86
    %v89 = vsub.f32 0.0, %v87
    %v90 = vsub.f32 0.0, %v88
    %v91 = vld [vmem:[#allocation2] sm:$0xff]
    %v92 = vadd.f32 %v89, %v90
    %v93 = vadd.f32 %v91, %v92
    %94 = vst [vmem:[#allocation2] sm:$0xff] %v93
    // Predicated region
    $region22: #{tpu_custom_call.1} parent=1 // pred_check
      %p95 = pneg %p60
    $region23: #{tpu_custom_call.1} parent=1 // pred_check_branch
      %97 = sbr.rel (%p95) target = $region25
    $region24: #{tpu_custom_call.1} parent=1 // pred_region
      %v98 = vld [vmem:[#allocation2] sm:$0xff]
      %99 = vadd.xlane.f32.xlu0 %v98
      %v100 = vpop.xlane.xlu0 %99
      %v101 = vrot.slane %v100, 4
      %v102 = vadd.f32 %v100, %v101
      %v103 = vrot.slane %v102, 2
      %v104 = vadd.f32 %v102, %v103
      %v105 = vrot.slane %v104, 1
      %v106 = vadd.f32 %v104, %v105
      %s107 = vtos %v106
      %v108 = vstv %s107
      %vm109 = vcmask 0
      %110 = vst.msk [vmem:[#allocation8] sm:$0x1] %vm109, %v108
    $region25: #{tpu_custom_call.1} parent=1 // pred_fallthru
      _
    // Predicated region
    $region26: #{tpu_custom_call.1} parent=1 // pred_check
      _
    $region27: #{tpu_custom_call.1} parent=1 // pred_check_branch
      %112 = sbr.rel (0) target = $region29
    $region28: #{tpu_custom_call.1} parent=1 // pred_region
      %s114 = ssub.s32 16, 16
      %115 = vsyncadd [#allocation5], %s114
      %s117 = sshll.u32 [#allocation8], 4
      %s118 = int_to_ptr.vmem [resolvable:$true] %s117
      %120 = dma.vmem_to_hbm [thread:$0]  %s118, 16, %s2, [#allocation5]
    $region29: #{tpu_custom_call.1} parent=1 // pred_fallthru
      _
    // Predicated region
    $region30: #{tpu_custom_call.1} parent=1 // pred_check
      _
    $region31: #{tpu_custom_call.1} parent=1 // pred_check_branch
      %122 = sbr.rel (0) target = $region33
    $region32: #{tpu_custom_call.1} parent=1 // pred_region
      %123 = dma.done [#allocation5], 16
    $region33: #{tpu_custom_call.1} parent=1 // pred_fallthru
      _
    %124 = vsyncpa [#allocation4], 1
    %125 = vsyncpa [#allocation7], 1
    %126 = vsyncpa [#allocation5], 1

</llo_original>
